<compile_context>
chip_gen: v7x
topology: tpu7x:2x2x1
jax: 0.10.0
libtpu: 0.0.40
codegen_flags: <defaults>
</compile_context>

<pallas_src>
import math

import jax
import jax.numpy as jnp
from jax.experimental import pallas as pl
from jax.experimental.pallas import tpu as pltpu

N = 1
HIDDEN = 64
TILE_M_MAX = 4096  # (64, 4096) f32 activations = 1 MiB each; total VMEM << 32 MiB


def _sigmoid(z):
    # sigmoid(z) == 0.5 * (tanh(z/2) + 1)  -- exact identity, single EUP op.
    return 0.5 * jnp.tanh(0.5 * z) + 0.5


def ktrained_kernel(q_ref, p_ref,
                    w1q, w1p, b1, w2, b2, w3, b3, w4, b4, w5, b5, w6, b6,
                    out_ref):
    """5x (Linear + Sigmoid) -> Linear, all in (feature, TILE_M) layout."""
    f32 = jnp.float32
    # First layer: x = [q; p] is never materialized.  With in_features = 2N = 2
    # the matmul degenerates to two outer products, so do them on the VPU via
    # broadcasting (w1q: (H,1), q_ref: (N,TILE_M)) instead of K=1 MXU passes.
    h = _sigmoid(w1q[...] * q_ref[...] + w1p[...] * p_ref[...] + b1[...])
    h = _sigmoid(jnp.dot(w2[...], h, preferred_element_type=f32) + b2[...])
    h = _sigmoid(jnp.dot(w3[...], h, preferred_element_type=f32) + b3[...])
    h = _sigmoid(jnp.dot(w4[...], h, preferred_element_type=f32) + b4[...])
    h = _sigmoid(jnp.dot(w5[...], h, preferred_element_type=f32) + b5[...])
    out_ref[...] = jnp.dot(w6[...], h, preferred_element_type=f32) + b6[...]


def init_params(key, n=N, hidden=HIDDEN):
    """Deterministic init mirroring the PyTorch module.

    Weights (stored (out, in) like nn.Linear): uniform(+-sqrt(6/in_features)).
    Biases  (stored (out, 1)): PyTorch nn.Linear default uniform(+-1/sqrt(in)).
    b param: zeros (2N, 1)   (the module's self.b).
    """
    dims = [2 * n, hidden, hidden, hidden, hidden, hidden, 2 * n]
    params = []
    for i in range(6):
        din, dout = dims[i], dims[i + 1]
        key, kw, kb = jax.random.split(key, 3)
        w_bound = math.sqrt(6.0 / din)
        b_bound = 1.0 / math.sqrt(din)
        w = jax.random.uniform(kw, (dout, din), jnp.float32, -w_bound, w_bound)
        b = jax.random.uniform(kb, (dout, 1), jnp.float32, -b_bound, b_bound)
        params.append(w)
        params.append(b)
    params.append(jnp.zeros((2 * n, 1), jnp.float32))  # self.b
    return params


def _round_up(x, m):
    return ((x + m - 1) // m) * m


def ktrained_forward(q, p, params, tile_m=TILE_M_MAX):
    """q, p: (B, T, N) float32.  Returns (K[..., :N], K[..., N:2N])."""
    B, T, n = q.shape
    M = B * T

    # Transposed layout: features on sublane, rows on lane (lane-dense I/O).
    q_t = q.astype(jnp.float32).reshape(M, n).T          # (n, M)
    p_t = p.astype(jnp.float32).reshape(M, n).T          # (n, M)

    tile_m = min(tile_m, _round_up(M, 128))
    m_pad = _round_up(M, tile_m)
    if m_pad != M:
        pad = ((0, 0), (0, m_pad - M))
        q_t = jnp.pad(q_t, pad)
        p_t = jnp.pad(p_t, pad)

    w1, b1 = params[0], params[1]
    b6_eff = params[11] + params[12]                      # fold self.b into last bias
    kparams = [w1[:, :n], w1[:, n:], b1,
               params[2], params[3], params[4], params[5],
               params[6], params[7], params[8], params[9],
               params[10], b6_eff]

    row_spec = pl.BlockSpec((n, tile_m), lambda i: (0, i))
    const_specs = [pl.BlockSpec(a.shape, lambda i: (0, 0)) for a in kparams]

    out = pl.pallas_call(
        ktrained_kernel,
        out_shape=jax.ShapeDtypeStruct((2 * n, m_pad), jnp.float32),
        grid=(m_pad // tile_m,),
        in_specs=[row_spec, row_spec] + const_specs,
        out_specs=pl.BlockSpec((2 * n, tile_m), lambda i: (0, i)),
        compiler_params=pltpu.CompilerParams(
            dimension_semantics=("parallel",),
            vmem_limit_bytes=32 * 1024 * 1024),
    )(q_t, p_t, *kparams)

    k = out[:, :M]                                        # (2n, M)
    dq_dt = k[:n, :].T.reshape(B, T, n)
    dp_dt = k[n:, :].T.reshape(B, T, n)
    return dq_dt, dp_dt


def _reference_forward(q, p, params):
    """Pure-JAX reference for sanity checking (row-major layout)."""
    x = jnp.concatenate([q, p], axis=2).astype(jnp.float32)
    h = x
    for i in range(5):
        w, b = params[2 * i], params[2 * i + 1]
        h = jax.nn.sigmoid(h @ w.T + b[:, 0])
    w6, b6 = params[10], params[11]
    k = h @ w6.T + b6[:, 0] + params[12][:, 0]
    n = q.shape[2]
    return k[:, :, :n], k[:, :, n:2 * n]


if __name__ == "__main__":
    key = jax.random.PRNGKey(0)
    kparam_key, kq, kp = jax.random.split(key, 3)

    params = init_params(kparam_key)

    # Small shapes consistent with the module's (batch, seq, N) convention.
    B, T = 2, 8
    q = jax.random.normal(kq, (B, T, N), jnp.float32)
    p = jax.random.normal(kp, (B, T, N), jnp.float32)

    dq_dt, dp_dt = ktrained_forward(q, p, params)
    dq_dt = jax.block_until_ready(dq_dt)
    dp_dt = jax.block_until_ready(dp_dt)

    ref_dq, ref_dp = _reference_forward(q, p, params)
    assert dq_dt.shape == (B, T, N) and dp_dt.shape == (B, T, N)
    assert jnp.allclose(dq_dt, ref_dq, atol=2e-5, rtol=1e-5)
    assert jnp.allclose(dp_dt, ref_dp, atol=2e-5, rtol=1e-5)

    # Second check: multi-step grid with padded M (exercises the pipeline).
    B2, T2 = 3, 1500
    q2 = jax.random.normal(jax.random.PRNGKey(1), (B2, T2, N), jnp.float32)
    p2 = jax.random.normal(jax.random.PRNGKey(2), (B2, T2, N), jnp.float32)
    dq2, dp2 = ktrained_forward(q2, p2, params, tile_m=512)
    dq2 = jax.block_until_ready(dq2)
    dp2 = jax.block_until_ready(dp2)
    ref_dq2, ref_dp2 = _reference_forward(q2, p2, params)
    assert jnp.allclose(dq2, ref_dq2, atol=2e-5, rtol=1e-5)
    assert jnp.allclose(dp2, ref_dp2, atol=2e-5, rtol=1e-5)

    print("KERNEL_OK")
</pallas_src>

<mosaic_0001>
module attributes {stable_mosaic.version = 11 : i64} {
  func.func @ktrained_kernel(%arg0: i32, %arg1: memref<1x128xf32, #tpu.memory_space<vmem>>, %arg2: memref<1x128xf32, #tpu.memory_space<vmem>>, %arg3: memref<64x1xf32, #tpu.memory_space<vmem>>, %arg4: memref<64x1xf32, #tpu.memory_space<vmem>>, %arg5: memref<64x1xf32, #tpu.memory_space<vmem>>, %arg6: memref<64x64xf32, #tpu.memory_space<vmem>>, %arg7: memref<64x1xf32, #tpu.memory_space<vmem>>, %arg8: memref<64x64xf32, #tpu.memory_space<vmem>>, %arg9: memref<64x1xf32, #tpu.memory_space<vmem>>, %arg10: memref<64x64xf32, #tpu.memory_space<vmem>>, %arg11: memref<64x1xf32, #tpu.memory_space<vmem>>, %arg12: memref<64x64xf32, #tpu.memory_space<vmem>>, %arg13: memref<64x1xf32, #tpu.memory_space<vmem>>, %arg14: memref<2x64xf32, #tpu.memory_space<vmem>>, %arg15: memref<2x1xf32, #tpu.memory_space<vmem>>, %arg16: memref<2x128xf32, #tpu.memory_space<vmem>>) attributes {dimension_semantics = [#tpu.dimension_semantics<parallel>], iteration_bounds = array<i64: 1>, scalar_prefetch = 0 : i64, scratch_operands = 0 : i64, tpu.core_type = #tpu.core_type<tc>, window_params = [{transform_indices = @transform_0, window_bounds = array<i64: 1, 128>}, {transform_indices = @transform_1, window_bounds = array<i64: 1, 128>}, {pipeline_mode = #tpu.pipeline_mode<synchronous>, transform_indices = @transform_2, window_bounds = array<i64: 64, 1>}, {pipeline_mode = #tpu.pipeline_mode<synchronous>, transform_indices = @transform_3, window_bounds = array<i64: 64, 1>}, {pipeline_mode = #tpu.pipeline_mode<synchronous>, transform_indices = @transform_4, window_bounds = array<i64: 64, 1>}, {pipeline_mode = #tpu.pipeline_mode<synchronous>, transform_indices = @transform_5, window_bounds = array<i64: 64, 64>}, {pipeline_mode = #tpu.pipeline_mode<synchronous>, transform_indices = @transform_6, window_bounds = array<i64: 64, 1>}, {pipeline_mode = #tpu.pipeline_mode<synchronous>, transform_indices = @transform_7, window_bounds = array<i64: 64, 64>}, {pipeline_mode = #tpu.pipeline_mode<synchronous>, transform_indices = @transform_8, window_bounds = array<i64: 64, 1>}, {pipeline_mode = #tpu.pipeline_mode<synchronous>, transform_indices = @transform_9, window_bounds = array<i64: 64, 64>}, {pipeline_mode = #tpu.pipeline_mode<synchronous>, transform_indices = @transform_10, window_bounds = array<i64: 64, 1>}, {pipeline_mode = #tpu.pipeline_mode<synchronous>, transform_indices = @transform_11, window_bounds = array<i64: 64, 64>}, {pipeline_mode = #tpu.pipeline_mode<synchronous>, transform_indices = @transform_12, window_bounds = array<i64: 64, 1>}, {pipeline_mode = #tpu.pipeline_mode<synchronous>, transform_indices = @transform_13, window_bounds = array<i64: 2, 64>}, {pipeline_mode = #tpu.pipeline_mode<synchronous>, transform_indices = @transform_14, window_bounds = array<i64: 2, 1>}, {transform_indices = @transform_15, window_bounds = array<i64: 2, 128>}]} {
    %c0 = arith.constant 0 : index
    %c0_0 = arith.constant 0 : index
    %0 = vector.load %arg3[%c0, %c0_0] : memref<64x1xf32, #tpu.memory_space<vmem>>, vector<64x1xf32>
    %c0_1 = arith.constant 0 : index
    %c0_2 = arith.constant 0 : index
    %1 = vector.load %arg1[%c0_1, %c0_2] : memref<1x128xf32, #tpu.memory_space<vmem>>, vector<1x128xf32>
    %2 = vector.broadcast %0 : vector<64x1xf32> to vector<64x128xf32>
    %3 = vector.broadcast %1 : vector<1x128xf32> to vector<64x128xf32>
    %4 = arith.mulf %2, %3 : vector<64x128xf32>
    %c0_3 = arith.constant 0 : index
    %c0_4 = arith.constant 0 : index
    %5 = vector.load %arg4[%c0_3, %c0_4] : memref<64x1xf32, #tpu.memory_space<vmem>>, vector<64x1xf32>
    %c0_5 = arith.constant 0 : index
    %c0_6 = arith.constant 0 : index
    %6 = vector.load %arg2[%c0_5, %c0_6] : memref<1x128xf32, #tpu.memory_space<vmem>>, vector<1x128xf32>
    %7 = vector.broadcast %5 : vector<64x1xf32> to vector<64x128xf32>
    %8 = vector.broadcast %6 : vector<1x128xf32> to vector<64x128xf32>
    %9 = arith.mulf %7, %8 : vector<64x128xf32>
    %10 = arith.addf %4, %9 : vector<64x128xf32>
    %c0_7 = arith.constant 0 : index
    %c0_8 = arith.constant 0 : index
    %11 = vector.load %arg5[%c0_7, %c0_8] : memref<64x1xf32, #tpu.memory_space<vmem>>, vector<64x1xf32>
    %12 = vector.broadcast %11 : vector<64x1xf32> to vector<64x128xf32>
    %13 = arith.addf %10, %12 : vector<64x128xf32>
    %cst = arith.constant 5.000000e-01 : f32
    %14 = vector.broadcast %cst : f32 to vector<64x128xf32>
    %15 = arith.mulf %14, %13 : vector<64x128xf32>
    %16 = math.tanh %15 : vector<64x128xf32>
    %cst_9 = arith.constant 5.000000e-01 : f32
    %17 = vector.broadcast %cst_9 : f32 to vector<64x128xf32>
    %18 = arith.mulf %17, %16 : vector<64x128xf32>
    %cst_10 = arith.constant 5.000000e-01 : f32
    %19 = vector.broadcast %cst_10 : f32 to vector<64x128xf32>
    %20 = arith.addf %18, %19 : vector<64x128xf32>
    %c0_11 = arith.constant 0 : index
    %c0_12 = arith.constant 0 : index
    %21 = vector.load %arg6[%c0_11, %c0_12] : memref<64x64xf32, #tpu.memory_space<vmem>>, vector<64x64xf32>
    %cst_13 = arith.constant dense<0.000000e+00> : vector<64x128xf32>
    %22 = tpu.matmul %21, %20, %cst_13 {dimension_numbers = #tpu.dot_dimension_numbers<[1], [0], [0], [1], [0, 0, 1, 1], [], []>} : vector<64x64xf32>, vector<64x128xf32>, vector<64x128xf32> -> vector<64x128xf32>
    %c0_14 = arith.constant 0 : index
    %c0_15 = arith.constant 0 : index
    %23 = vector.load %arg7[%c0_14, %c0_15] : memref<64x1xf32, #tpu.memory_space<vmem>>, vector<64x1xf32>
    %24 = vector.broadcast %23 : vector<64x1xf32> to vector<64x128xf32>
    %25 = arith.addf %22, %24 : vector<64x128xf32>
    %cst_16 = arith.constant 5.000000e-01 : f32
    %26 = vector.broadcast %cst_16 : f32 to vector<64x128xf32>
    %27 = arith.mulf %26, %25 : vector<64x128xf32>
    %28 = math.tanh %27 : vector<64x128xf32>
    %cst_17 = arith.constant 5.000000e-01 : f32
    %29 = vector.broadcast %cst_17 : f32 to vector<64x128xf32>
    %30 = arith.mulf %29, %28 : vector<64x128xf32>
    %cst_18 = arith.constant 5.000000e-01 : f32
    %31 = vector.broadcast %cst_18 : f32 to vector<64x128xf32>
    %32 = arith.addf %30, %31 : vector<64x128xf32>
    %c0_19 = arith.constant 0 : index
    %c0_20 = arith.constant 0 : index
    %33 = vector.load %arg8[%c0_19, %c0_20] : memref<64x64xf32, #tpu.memory_space<vmem>>, vector<64x64xf32>
    %cst_21 = arith.constant dense<0.000000e+00> : vector<64x128xf32>
    %34 = tpu.matmul %33, %32, %cst_21 {dimension_numbers = #tpu.dot_dimension_numbers<[1], [0], [0], [1], [0, 0, 1, 1], [], []>} : vector<64x64xf32>, vector<64x128xf32>, vector<64x128xf32> -> vector<64x128xf32>
    %c0_22 = arith.constant 0 : index
    %c0_23 = arith.constant 0 : index
    %35 = vector.load %arg9[%c0_22, %c0_23] : memref<64x1xf32, #tpu.memory_space<vmem>>, vector<64x1xf32>
    %36 = vector.broadcast %35 : vector<64x1xf32> to vector<64x128xf32>
    %37 = arith.addf %34, %36 : vector<64x128xf32>
    %cst_24 = arith.constant 5.000000e-01 : f32
    %38 = vector.broadcast %cst_24 : f32 to vector<64x128xf32>
    %39 = arith.mulf %38, %37 : vector<64x128xf32>
    %40 = math.tanh %39 : vector<64x128xf32>
    %cst_25 = arith.constant 5.000000e-01 : f32
    %41 = vector.broadcast %cst_25 : f32 to vector<64x128xf32>
    %42 = arith.mulf %41, %40 : vector<64x128xf32>
    %cst_26 = arith.constant 5.000000e-01 : f32
    %43 = vector.broadcast %cst_26 : f32 to vector<64x128xf32>
    %44 = arith.addf %42, %43 : vector<64x128xf32>
    %c0_27 = arith.constant 0 : index
    %c0_28 = arith.constant 0 : index
    %45 = vector.load %arg10[%c0_27, %c0_28] : memref<64x64xf32, #tpu.memory_space<vmem>>, vector<64x64xf32>
    %cst_29 = arith.constant dense<0.000000e+00> : vector<64x128xf32>
    %46 = tpu.matmul %45, %44, %cst_29 {dimension_numbers = #tpu.dot_dimension_numbers<[1], [0], [0], [1], [0, 0, 1, 1], [], []>} : vector<64x64xf32>, vector<64x128xf32>, vector<64x128xf32> -> vector<64x128xf32>
    %c0_30 = arith.constant 0 : index
    %c0_31 = arith.constant 0 : index
    %47 = vector.load %arg11[%c0_30, %c0_31] : memref<64x1xf32, #tpu.memory_space<vmem>>, vector<64x1xf32>
    %48 = vector.broadcast %47 : vector<64x1xf32> to vector<64x128xf32>
    %49 = arith.addf %46, %48 : vector<64x128xf32>
    %cst_32 = arith.constant 5.000000e-01 : f32
    %50 = vector.broadcast %cst_32 : f32 to vector<64x128xf32>
    %51 = arith.mulf %50, %49 : vector<64x128xf32>
    %52 = math.tanh %51 : vector<64x128xf32>
    %cst_33 = arith.constant 5.000000e-01 : f32
    %53 = vector.broadcast %cst_33 : f32 to vector<64x128xf32>
    %54 = arith.mulf %53, %52 : vector<64x128xf32>
    %cst_34 = arith.constant 5.000000e-01 : f32
    %55 = vector.broadcast %cst_34 : f32 to vector<64x128xf32>
    %56 = arith.addf %54, %55 : vector<64x128xf32>
    %c0_35 = arith.constant 0 : index
    %c0_36 = arith.constant 0 : index
    %57 = vector.load %arg12[%c0_35, %c0_36] : memref<64x64xf32, #tpu.memory_space<vmem>>, vector<64x64xf32>
    %cst_37 = arith.constant dense<0.000000e+00> : vector<64x128xf32>
    %58 = tpu.matmul %57, %56, %cst_37 {dimension_numbers = #tpu.dot_dimension_numbers<[1], [0], [0], [1], [0, 0, 1, 1], [], []>} : vector<64x64xf32>, vector<64x128xf32>, vector<64x128xf32> -> vector<64x128xf32>
    %c0_38 = arith.constant 0 : index
    %c0_39 = arith.constant 0 : index
    %59 = vector.load %arg13[%c0_38, %c0_39] : memref<64x1xf32, #tpu.memory_space<vmem>>, vector<64x1xf32>
    %60 = vector.broadcast %59 : vector<64x1xf32> to vector<64x128xf32>
    %61 = arith.addf %58, %60 : vector<64x128xf32>
    %cst_40 = arith.constant 5.000000e-01 : f32
    %62 = vector.broadcast %cst_40 : f32 to vector<64x128xf32>
    %63 = arith.mulf %62, %61 : vector<64x128xf32>
    %64 = math.tanh %63 : vector<64x128xf32>
    %cst_41 = arith.constant 5.000000e-01 : f32
    %65 = vector.broadcast %cst_41 : f32 to vector<64x128xf32>
    %66 = arith.mulf %65, %64 : vector<64x128xf32>
    %cst_42 = arith.constant 5.000000e-01 : f32
    %67 = vector.broadcast %cst_42 : f32 to vector<64x128xf32>
    %68 = arith.addf %66, %67 : vector<64x128xf32>
    %c0_43 = arith.constant 0 : index
    %c0_44 = arith.constant 0 : index
    %69 = vector.load %arg14[%c0_43, %c0_44] : memref<2x64xf32, #tpu.memory_space<vmem>>, vector<2x64xf32>
    %cst_45 = arith.constant dense<0.000000e+00> : vector<2x128xf32>
    %70 = tpu.matmul %69, %68, %cst_45 {dimension_numbers = #tpu.dot_dimension_numbers<[1], [0], [0], [1], [0, 0, 1, 1], [], []>} : vector<2x64xf32>, vector<64x128xf32>, vector<2x128xf32> -> vector<2x128xf32>
    %c0_46 = arith.constant 0 : index
    %c0_47 = arith.constant 0 : index
    %71 = vector.load %arg15[%c0_46, %c0_47] : memref<2x1xf32, #tpu.memory_space<vmem>>, vector<2x1xf32>
    %72 = vector.broadcast %71 : vector<2x1xf32> to vector<2x128xf32>
    %73 = arith.addf %70, %72 : vector<2x128xf32>
    %c0_48 = arith.constant 0 : index
    %c0_49 = arith.constant 0 : index
    %74 = vector.load %arg16[%c0_48, %c0_49] : memref<2x128xf32, #tpu.memory_space<vmem>>, vector<2x128xf32>
    tpu.vector_store %arg16[%c0_48, %c0_49], %73 {strides = array<i32>} : memref<2x128xf32, #tpu.memory_space<vmem>>, vector<2x128xf32>,
    return
  }
  func.func @transform_0(%arg0: i32) -> (i32, i32) {
    %c0_i32 = arith.constant 0 : i32
    %c0_i32_0 = arith.constant 0 : i32
    return %c0_i32, %arg0 : i32, i32
  }
  func.func @transform_1(%arg0: i32) -> (i32, i32) {
    %c0_i32 = arith.constant 0 : i32
    %c0_i32_0 = arith.constant 0 : i32
    return %c0_i32, %arg0 : i32, i32
  }
  func.func @transform_2(%arg0: i32) -> (i32, i32) {
    %c0_i32 = arith.constant 0 : i32
    %c0_i32_0 = arith.constant 0 : i32
    %c0_i32_1 = arith.constant 0 : i32
    return %c0_i32, %c0_i32_0 : i32, i32
  }
  func.func @transform_3(%arg0: i32) -> (i32, i32) {
    %c0_i32 = arith.constant 0 : i32
    %c0_i32_0 = arith.constant 0 : i32
    %c0_i32_1 = arith.constant 0 : i32
    return %c0_i32, %c0_i32_0 : i32, i32
  }
  func.func @transform_4(%arg0: i32) -> (i32, i32) {
    %c0_i32 = arith.constant 0 : i32
    %c0_i32_0 = arith.constant 0 : i32
    %c0_i32_1 = arith.constant 0 : i32
    return %c0_i32, %c0_i32_0 : i32, i32
  }
  func.func @transform_5(%arg0: i32) -> (i32, i32) {
    %c0_i32 = arith.constant 0 : i32
    %c0_i32_0 = arith.constant 0 : i32
    %c0_i32_1 = arith.constant 0 : i32
    return %c0_i32, %c0_i32_0 : i32, i32
  }
  func.func @transform_6(%arg0: i32) -> (i32, i32) {
    %c0_i32 = arith.constant 0 : i32
    %c0_i32_0 = arith.constant 0 : i32
    %c0_i32_1 = arith.constant 0 : i32
    return %c0_i32, %c0_i32_0 : i32, i32
  }
  func.func @transform_7(%arg0: i32) -> (i32, i32) {
    %c0_i32 = arith.constant 0 : i32
    %c0_i32_0 = arith.constant 0 : i32
    %c0_i32_1 = arith.constant 0 : i32
    return %c0_i32, %c0_i32_0 : i32, i32
  }
  func.func @transform_8(%arg0: i32) -> (i32, i32) {
    %c0_i32 = arith.constant 0 : i32
    %c0_i32_0 = arith.constant 0 : i32
    %c0_i32_1 = arith.constant 0 : i32
    return %c0_i32, %c0_i32_0 : i32, i32
  }
  func.func @transform_9(%arg0: i32) -> (i32, i32) {
    %c0_i32 = arith.constant 0 : i32
    %c0_i32_0 = arith.constant 0 : i32
    %c0_i32_1 = arith.constant 0 : i32
    return %c0_i32, %c0_i32_0 : i32, i32
  }
  func.func @transform_10(%arg0: i32) -> (i32, i32) {
    %c0_i32 = arith.constant 0 : i32
    %c0_i32_0 = arith.constant 0 : i32
    %c0_i32_1 = arith.constant 0 : i32
    return %c0_i32, %c0_i32_0 : i32, i32
  }
  func.func @transform_11(%arg0: i32) -> (i32, i32) {
    %c0_i32 = arith.constant 0 : i32
    %c0_i32_0 = arith.constant 0 : i32
    %c0_i32_1 = arith.constant 0 : i32
    return %c0_i32, %c0_i32_0 : i32, i32
  }
  func.func @transform_12(%arg0: i32) -> (i32, i32) {
    %c0_i32 = arith.constant 0 : i32
    %c0_i32_0 = arith.constant 0 : i32
    %c0_i32_1 = arith.constant 0 : i32
    return %c0_i32, %c0_i32_0 : i32, i32
  }
  func.func @transform_13(%arg0: i32) -> (i32, i32) {
    %c0_i32 = arith.constant 0 : i32
    %c0_i32_0 = arith.constant 0 : i32
    %c0_i32_1 = arith.constant 0 : i32
    return %c0_i32, %c0_i32_0 : i32, i32
  }
  func.func @transform_14(%arg0: i32) -> (i32, i32) {
    %c0_i32 = arith.constant 0 : i32
    %c0_i32_0 = arith.constant 0 : i32
    %c0_i32_1 = arith.constant 0 : i32
    return %c0_i32, %c0_i32_0 : i32, i32
  }
  func.func @transform_15(%arg0: i32) -> (i32, i32) {
    %c0_i32 = arith.constant 0 : i32
    %c0_i32_0 = arith.constant 0 : i32
    return %c0_i32, %arg0 : i32, i32
  }
}

</mosaic_0001>

<llo_original>
// kernel: tpu_custom_call.1
$region0: #{tpu_custom_call.1}
  #allocation0 [shape = 'u32[]', space=smem, size = 0x4, offset = 0x4, fixed_abs, tag = 'smem constant byte address 0x4 - core index']
  #allocation1 [shape = 'u32[144,128]{1,0:T(1,128)}', space=vmem, size = 0x12000, scoped, tag = 'internal scratch']
  %s0 = inlined_call_operand.vmem [shape: f32[1,128], index: 0, kind: input, shape index: {}]
  %s1 = inlined_call_operand.vmem [shape: f32[1,128], index: 1, kind: input, shape index: {}]
  %s2 = inlined_call_operand.vmem [shape: f32[64,1], index: 2, kind: input, shape index: {}]
  %s3 = inlined_call_operand.vmem [shape: f32[64,1], index: 3, kind: input, shape index: {}]
  %s4 = inlined_call_operand.vmem [shape: f32[64,1], index: 4, kind: input, shape index: {}]
  %s5 = inlined_call_operand.vmem [shape: f32[64,64], index: 5, kind: input, shape index: {}]
  %s6 = inlined_call_operand.vmem [shape: f32[64,1], index: 6, kind: input, shape index: {}]
  %s7 = inlined_call_operand.vmem [shape: f32[64,64], index: 7, kind: input, shape index: {}]
  %s8 = inlined_call_operand.vmem [shape: f32[64,1], index: 8, kind: input, shape index: {}]
  %s9 = inlined_call_operand.vmem [shape: f32[64,64], index: 9, kind: input, shape index: {}]
  %s10 = inlined_call_operand.vmem [shape: f32[64,1], index: 10, kind: input, shape index: {}]
  %s11 = inlined_call_operand.vmem [shape: f32[64,64], index: 11, kind: input, shape index: {}]
  %s12 = inlined_call_operand.vmem [shape: f32[64,1], index: 12, kind: input, shape index: {}]
  %s13 = inlined_call_operand.vmem [shape: f32[2,64], index: 13, kind: input, shape index: {}]
  %s14 = inlined_call_operand.vmem [shape: f32[2,1], index: 14, kind: input, shape index: {}]
  %s15 = inlined_call_operand.hbm [shape: f32[2,128], index: 15, kind: output, shape index: {}]
  %s16 = sld [smem:[#allocation0]]
  $region70: #{tpu_custom_call.1} parent=0
    _
  %s18 = ssub.s32 1, %s16
  %s19 = scalar_select 0, %s18, %s16
  $region1: #{tpu_custom_call.1} parent=0
    #allocation2 [shape = 'u8[1024]{0}', space=vmem, size = 0x400, scoped, tag = 'output window, operand 0, single buffered']
    #allocation3 [shape = 's32[1]{0}', space=sflag, size = 0x4, scoped, tag = 'scoped memory for tpu_custom_call.1']
    %20 = vsyncpa [#allocation3], 0
    // Predicated region
    $region2: #{tpu_custom_call.1} parent=1 // pred_check
      _
    $region3: #{tpu_custom_call.1} parent=1 // pred_check_branch
      %22 = sbr.rel (0) target = $region5
    $region4: #{tpu_custom_call.1} parent=1 // pred_region
      _
    $region5: #{tpu_custom_call.1} parent=1 // pred_fallthru
      _
    // Predicated region
    $region6: #{tpu_custom_call.1} parent=1 // pred_check
      _
    $region7: #{tpu_custom_call.1} parent=1 // pred_check_branch
      %24 = sbr.rel (0) target = $region9
    $region8: #{tpu_custom_call.1} parent=1 // pred_region
      _
    $region9: #{tpu_custom_call.1} parent=1 // pred_fallthru
      _
    // Predicated region
    $region10: #{tpu_custom_call.1} parent=1 // pred_check
      _
    $region11: #{tpu_custom_call.1} parent=1 // pred_check_branch
      %26 = sbr.rel (0) target = $region13
    $region12: #{tpu_custom_call.1} parent=1 // pred_region
      _
    $region13: #{tpu_custom_call.1} parent=1 // pred_fallthru
      _
    // Predicated region
    $region14: #{tpu_custom_call.1} parent=1 // pred_check
      _
    $region15: #{tpu_custom_call.1} parent=1 // pred_check_branch
      %28 = sbr.rel (0) target = $region17
    $region16: #{tpu_custom_call.1} parent=1 // pred_region
      _
    $region17: #{tpu_custom_call.1} parent=1 // pred_fallthru
      _
    // Predicated region
    $region18: #{tpu_custom_call.1} parent=1 // pred_check
      _
    $region19: #{tpu_custom_call.1} parent=1 // pred_check_branch
      %30 = sbr.rel (0) target = $region21
    $region20: #{tpu_custom_call.1} parent=1 // pred_region
      _
    $region21: #{tpu_custom_call.1} parent=1 // pred_fallthru
      _
    // Predicated region
    $region22: #{tpu_custom_call.1} parent=1 // pred_check
      _
    $region23: #{tpu_custom_call.1} parent=1 // pred_check_branch
      %32 = sbr.rel (0) target = $region25
    $region24: #{tpu_custom_call.1} parent=1 // pred_region
      _
    $region25: #{tpu_custom_call.1} parent=1 // pred_fallthru
      _
    // Predicated region
    $region26: #{tpu_custom_call.1} parent=1 // pred_check
      _
    $region27: #{tpu_custom_call.1} parent=1 // pred_check_branch
      %34 = sbr.rel (0) target = $region29
    $region28: #{tpu_custom_call.1} parent=1 // pred_region
      _
    $region29: #{tpu_custom_call.1} parent=1 // pred_fallthru
      _
    // Predicated region
    $region30: #{tpu_custom_call.1} parent=1 // pred_check
      _
    $region31: #{tpu_custom_call.1} parent=1 // pred_check_branch
      %36 = sbr.rel (0) target = $region33
    $region32: #{tpu_custom_call.1} parent=1 // pred_region
      _
    $region33: #{tpu_custom_call.1} parent=1 // pred_fallthru
      _
    // Predicated region
    $region34: #{tpu_custom_call.1} parent=1 // pred_check
      _
    $region35: #{tpu_custom_call.1} parent=1 // pred_check_branch
      %38 = sbr.rel (0) target = $region37
    $region36: #{tpu_custom_call.1} parent=1 // pred_region
      _
    $region37: #{tpu_custom_call.1} parent=1 // pred_fallthru
      _
    // Predicated region
    $region38: #{tpu_custom_call.1} parent=1 // pred_check
      _
    $region39: #{tpu_custom_call.1} parent=1 // pred_check_branch
      %40 = sbr.rel (0) target = $region41
    $region40: #{tpu_custom_call.1} parent=1 // pred_region
      _
    $region41: #{tpu_custom_call.1} parent=1 // pred_fallthru
      _
    // Predicated region
    $region42: #{tpu_custom_call.1} parent=1 // pred_check
      _
    $region43: #{tpu_custom_call.1} parent=1 // pred_check_branch
      %42 = sbr.rel (0) target = $region45
    $region44: #{tpu_custom_call.1} parent=1 // pred_region
      _
    $region45: #{tpu_custom_call.1} parent=1 // pred_fallthru
      _
    // Predicated region
    $region46: #{tpu_custom_call.1} parent=1 // pred_check
      _
    $region47: #{tpu_custom_call.1} parent=1 // pred_check_branch
      %44 = sbr.rel (0) target = $region49
    $region48: #{tpu_custom_call.1} parent=1 // pred_region
      _
    $region49: #{tpu_custom_call.1} parent=1 // pred_fallthru
      _
    // Predicated region
    $region50: #{tpu_custom_call.1} parent=1 // pred_check
      _
    $region51: #{tpu_custom_call.1} parent=1 // pred_check_branch
      %46 = sbr.rel (0) target = $region53
    $region52: #{tpu_custom_call.1} parent=1 // pred_region
      _
    $region53: #{tpu_custom_call.1} parent=1 // pred_fallthru
      _
    // Predicated region
    $region54: #{tpu_custom_call.1} parent=1 // pred_check
      _
    $region55: #{tpu_custom_call.1} parent=1 // pred_check_branch
      %48 = sbr.rel (0) target = $region57
    $region56: #{tpu_custom_call.1} parent=1 // pred_region
      _
    $region57: #{tpu_custom_call.1} parent=1 // pred_fallthru
      _
    // Predicated region
    $region58: #{tpu_custom_call.1} parent=1 // pred_check
      _
    $region59: #{tpu_custom_call.1} parent=1 // pred_check_branch
      %50 = sbr.rel (0) target = $region61
    $region60: #{tpu_custom_call.1} parent=1 // pred_region
      _
    $region61: #{tpu_custom_call.1} parent=1 // pred_fallthru
      _
    %v51 = vld [vmem:[%s2] sm:$0xff]
    %v52 = vld [vmem:[%s2 + $0x8] sm:$0xff]
    %v53 = vld [vmem:[%s2 + $0x10] sm:$0xff]
    %v54 = vld [vmem:[%s2 + $0x18] sm:$0xff]
    %v55 = vld [vmem:[%s2 + $0x20] sm:$0xff]
    %v56 = vld [vmem:[%s2 + $0x28] sm:$0xff]
    %v57 = vld [vmem:[%s2 + $0x30] sm:$0xff]
    %v58 = vld [vmem:[%s2 + $0x38] sm:$0xff]
    %v59 = vld [vmem:[%s0] sm:$0x1]
    %61 = vset.pattern.permute.xlu0 0
    %62 = vperm.xlu0 %61, %v51
    %v63 = vpop.permute.xlu0 %62
    %66 = vset.pattern.permute.xlu0 0
    %67 = vperm.xlu0 %66, %v52
    %v68 = vpop.permute.xlu0 %67
    %71 = vset.pattern.permute.xlu0 0
    %72 = vperm.xlu0 %71, %v53
    %v73 = vpop.permute.xlu0 %72
    %76 = vset.pattern.permute.xlu0 0
    %77 = vperm.xlu0 %76, %v54
    %v78 = vpop.permute.xlu0 %77
    %81 = vset.pattern.permute.xlu0 0
    %82 = vperm.xlu0 %81, %v55
    %v83 = vpop.permute.xlu0 %82
    %86 = vset.pattern.permute.xlu0 0
    %87 = vperm.xlu0 %86, %v56
    %v88 = vpop.permute.xlu0 %87
    %91 = vset.pattern.permute.xlu0 0
    %92 = vperm.xlu0 %91, %v57
    %v93 = vpop.permute.xlu0 %92
    %96 = vset.pattern.permute.xlu0 0
    %97 = vperm.xlu0 %96, %v58
    %v98 = vpop.permute.xlu0 %97
    %v101 = vlaneseq
    %v102 = vshrl.u32 %v101, 7
    %v103 = vsub.s32 0, %v102
    %v104 = vrot.slane %v59, %v103
    %v106 = vmul.f32 %v63, %v104
    %v107 = vmul.f32 %v68, %v104
    %v108 = vmul.f32 %v73, %v104
    %v109 = vmul.f32 %v78, %v104
    %v110 = vmul.f32 %v83, %v104
    %v111 = vmul.f32 %v88, %v104
    %v112 = vmul.f32 %v93, %v104
    %v113 = vmul.f32 %v98, %v104
    %v114 = vld [vmem:[%s3] sm:$0xff]
    %v115 = vld [vmem:[%s3 + $0x8] sm:$0xff]
    %v116 = vld [vmem:[%s3 + $0x10] sm:$0xff]
    %v117 = vld [vmem:[%s3 + $0x18] sm:$0xff]
    %v118 = vld [vmem:[%s3 + $0x20] sm:$0xff]
    %v119 = vld [vmem:[%s3 + $0x28] sm:$0xff]
    %v120 = vld [vmem:[%s3 + $0x30] sm:$0xff]
    %v121 = vld [vmem:[%s3 + $0x38] sm:$0xff]
    %v122 = vld [vmem:[%s1] sm:$0x1]
    %124 = vset.pattern.permute.xlu0 0
    %125 = vperm.xlu0 %124, %v114
    %v126 = vpop.permute.xlu0 %125
    %129 = vset.pattern.permute.xlu0 0
    %130 = vperm.xlu0 %129, %v115
    %v131 = vpop.permute.xlu0 %130
    %134 = vset.pattern.permute.xlu0 0
    %135 = vperm.xlu0 %134, %v116
    %v136 = vpop.permute.xlu0 %135
    %139 = vset.pattern.permute.xlu0 0
    %140 = vperm.xlu0 %139, %v117
    %v141 = vpop.permute.xlu0 %140
    %144 = vset.pattern.permute.xlu0 0
    %145 = vperm.xlu0 %144, %v118
    %v146 = vpop.permute.xlu0 %145
    %149 = vset.pattern.permute.xlu0 0
    %150 = vperm.xlu0 %149, %v119
    %v151 = vpop.permute.xlu0 %150
    %154 = vset.pattern.permute.xlu0 0
    %155 = vperm.xlu0 %154, %v120
    %v156 = vpop.permute.xlu0 %155
    %159 = vset.pattern.permute.xlu0 0
    %160 = vperm.xlu0 %159, %v121
    %v161 = vpop.permute.xlu0 %160
    %v164 = vlaneseq
    %v165 = vshrl.u32 %v164, 7
    %v166 = vsub.s32 0, %v165
    %v167 = vrot.slane %v122, %v166
    %v169 = vmul.f32 %v126, %v167
    %v170 = vmul.f32 %v131, %v167
    %v171 = vmul.f32 %v136, %v167
    %v172 = vmul.f32 %v141, %v167
    %v173 = vmul.f32 %v146, %v167
    %v174 = vmul.f32 %v151, %v167
    %v175 = vmul.f32 %v156, %v167
    %v176 = vmul.f32 %v161, %v167
    %v177 = vadd.f32 %v106, %v169
    %v178 = vadd.f32 %v107, %v170
    %v179 = vadd.f32 %v108, %v171
    %v180 = vadd.f32 %v109, %v172
    %v181 = vadd.f32 %v110, %v173
    %v182 = vadd.f32 %v111, %v174
    %v183 = vadd.f32 %v112, %v175
    %v184 = vadd.f32 %v113, %v176
    %v185 = vld [vmem:[%s4] sm:$0xff]
    %v186 = vld [vmem:[%s4 + $0x8] sm:$0xff]
    %v187 = vld [vmem:[%s4 + $0x10] sm:$0xff]
    %v188 = vld [vmem:[%s4 + $0x18] sm:$0xff]
    %v189 = vld [vmem:[%s4 + $0x20] sm:$0xff]
    %v190 = vld [vmem:[%s4 + $0x28] sm:$0xff]
    %v191 = vld [vmem:[%s4 + $0x30] sm:$0xff]
    %v192 = vld [vmem:[%s4 + $0x38] sm:$0xff]
    %194 = vset.pattern.permute.xlu0 0
    %195 = vperm.xlu0 %194, %v185
    %v196 = vpop.permute.xlu0 %195
    %199 = vset.pattern.permute.xlu0 0
    %200 = vperm.xlu0 %199, %v186
    %v201 = vpop.permute.xlu0 %200
    %204 = vset.pattern.permute.xlu0 0
    %205 = vperm.xlu0 %204, %v187
    %v206 = vpop.permute.xlu0 %205
    %209 = vset.pattern.permute.xlu0 0
    %210 = vperm.xlu0 %209, %v188
    %v211 = vpop.permute.xlu0 %210
    %214 = vset.pattern.permute.xlu0 0
    %215 = vperm.xlu0 %214, %v189
    %v216 = vpop.permute.xlu0 %215
    %219 = vset.pattern.permute.xlu0 0
    %220 = vperm.xlu0 %219, %v190
    %v221 = vpop.permute.xlu0 %220
    %224 = vset.pattern.permute.xlu0 0
    %225 = vperm.xlu0 %224, %v191
    %v226 = vpop.permute.xlu0 %225
    %229 = vset.pattern.permute.xlu0 0
    %230 = vperm.xlu0 %229, %v192
    %v231 = vpop.permute.xlu0 %230
    %v233 = vadd.f32 %v177, %v196
    %v234 = vadd.f32 %v178, %v201
    %v235 = vadd.f32 %v179, %v206
    %v236 = vadd.f32 %v180, %v211
    %v237 = vadd.f32 %v181, %v216
    %v238 = vadd.f32 %v182, %v221
    %v239 = vadd.f32 %v183, %v226
    %v240 = vadd.f32 %v184, %v231
    %v241 = vmul.f32 %v233, 0.5
    %v242 = vmul.f32 %v234, 0.5
    %v243 = vmul.f32 %v235, 0.5
    %v244 = vmul.f32 %v236, 0.5
    %v245 = vmul.f32 %v237, 0.5
    %v246 = vmul.f32 %v238, 0.5
    %v247 = vmul.f32 %v239, 0.5
    %v248 = vmul.f32 %v240, 0.5
    %v249 = vtanh.pop %v241
    %v250 = vtanh.pop %v242
    %v251 = vtanh.pop %v243
    %v252 = vtanh.pop %v244
    %v253 = vtanh.pop %v245
    %v254 = vtanh.pop %v246
    %v255 = vtanh.pop %v247
    %v256 = vtanh.pop %v248
    %v257 = vmul.f32 %v249, 0.5
    %v258 = vmul.f32 %v250, 0.5
    %v259 = vmul.f32 %v251, 0.5
    %v260 = vmul.f32 %v252, 0.5
    %v261 = vmul.f32 %v253, 0.5
    %v262 = vmul.f32 %v254, 0.5
    %v263 = vmul.f32 %v255, 0.5
    %v264 = vmul.f32 %v256, 0.5
    %v265 = vadd.f32 %v257, 0.5
    %v266 = vadd.f32 %v258, 0.5
    %v267 = vadd.f32 %v259, 0.5
    %v268 = vadd.f32 %v260, 0.5
    %v269 = vadd.f32 %v261, 0.5
    %v270 = vadd.f32 %v262, 0.5
    %v271 = vadd.f32 %v263, 0.5
    %v272 = vadd.f32 %v264, 0.5
    %v273 = vld [vmem:[%s5] sm:$0xff]
    %v274 = vld [vmem:[%s5 + $0x8] sm:$0xff]
    %v275 = vld [vmem:[%s5 + $0x10] sm:$0xff]
    %v276 = vld [vmem:[%s5 + $0x18] sm:$0xff]
    %v277 = vld [vmem:[%s5 + $0x20] sm:$0xff]
    %v278 = vld [vmem:[%s5 + $0x28] sm:$0xff]
    %v279 = vld [vmem:[%s5 + $0x30] sm:$0xff]
    %v280 = vld [vmem:[%s5 + $0x38] sm:$0xff]
    %v281 = vld [vmem:[%s6] sm:$0xff]
    %v282 = vld [vmem:[%s6 + $0x8] sm:$0xff]
    %v283 = vld [vmem:[%s6 + $0x10] sm:$0xff]
    %v284 = vld [vmem:[%s6 + $0x18] sm:$0xff]
    %v285 = vld [vmem:[%s6 + $0x20] sm:$0xff]
    %v286 = vld [vmem:[%s6 + $0x28] sm:$0xff]
    %v287 = vld [vmem:[%s6 + $0x30] sm:$0xff]
    %v288 = vld [vmem:[%s6 + $0x38] sm:$0xff]
    %290 = vset.pattern.permute.xlu0 0
    %291 = vperm.xlu0 %290, %v281
    %v292 = vpop.permute.xlu0 %291
    %295 = vset.pattern.permute.xlu0 0
    %296 = vperm.xlu0 %295, %v282
    %v297 = vpop.permute.xlu0 %296
    %300 = vset.pattern.permute.xlu0 0
    %301 = vperm.xlu0 %300, %v283
    %v302 = vpop.permute.xlu0 %301
    %305 = vset.pattern.permute.xlu0 0
    %306 = vperm.xlu0 %305, %v284
    %v307 = vpop.permute.xlu0 %306
    %310 = vset.pattern.permute.xlu0 0
    %311 = vperm.xlu0 %310, %v285
    %v312 = vpop.permute.xlu0 %311
    %315 = vset.pattern.permute.xlu0 0
    %316 = vperm.xlu0 %315, %v286
    %v317 = vpop.permute.xlu0 %316
    %320 = vset.pattern.permute.xlu0 0
    %321 = vperm.xlu0 %320, %v287
    %v322 = vpop.permute.xlu0 %321
    %325 = vset.pattern.permute.xlu0 0
    %326 = vperm.xlu0 %325, %v288
    %v327 = vpop.permute.xlu0 %326
    %vm329 = vcmask 523264
    %v331 = vsel %vm329, %v273, 0
    %v334 = vsel %vm329, %v274, 0
    %v337 = vsel %vm329, %v275, 0
    %v340 = vsel %vm329, %v276, 0
    %v343 = vsel %vm329, %v277, 0
    %v346 = vsel %vm329, %v278, 0
    %v349 = vsel %vm329, %v279, 0
    %v352 = vsel %vm329, %v280, 0
    %354 = vmatprep.subr.mxu0 0.0
    %355 = vmatpush1.msra.mxu0 %v265
    %356 = vmatprep.subr.mxu0 0.0
    %357 = vmatpush1.msra.mxu0 %v266
    %358 = vmatprep.subr.mxu0 0.0
    %359 = vmatpush1.msra.mxu0 %v267
    %360 = vmatprep.subr.mxu0 0.0
    %361 = vmatpush1.msra.mxu0 %v268
    %362 = vmatprep.subr.mxu0 0.0
    %363 = vmatpush1.msra.mxu0 %v269
    %364 = vmatprep.subr.mxu0 0.0
    %365 = vmatpush1.msra.mxu0 %v270
    %366 = vmatprep.subr.mxu0 0.0
    %367 = vmatpush1.msra.mxu0 %v271
    %368 = vmatprep.subr.mxu0 0.0
    %369 = vmatpush1.msra.mxu0 %v272
    %370 = vmatprep.subr.mxu0 0.0
    %371 = vmatpush1.msra.mxu0 0.0
    %372 = vmatprep.subr.mxu0 0.0
    %373 = vmatpush1.msra.mxu0 0.0
    %374 = vmatprep.subr.mxu0 0.0
    %375 = vmatpush1.msra.mxu0 0.0
    %376 = vmatprep.subr.mxu0 0.0
    %377 = vmatpush1.msra.mxu0 0.0
    %378 = vmatprep.subr.mxu0 0.0
    %379 = vmatpush1.msra.mxu0 0.0
    %380 = vmatprep.subr.mxu0 0.0
    %381 = vmatpush1.msra.mxu0 0.0
    %382 = vmatprep.subr.mxu0 0.0
    %383 = vmatpush1.msra.mxu0 0.0
    %384 = vmatprep.subr.mxu0 0.0
    %385 = vmatpush1.msra.mxu0 0.0
    %386 = vmatprep.subr.mxu0 0.0
    %387 = vmatpush1.msra.mxu0 0.0
    %388 = vmatprep.subr.mxu0 0.0
    %389 = vmatpush1.msra.mxu0 0.0
    %390 = vmatprep.subr.mxu0 0.0
    %391 = vmatpush1.msra.mxu0 0.0
    %392 = vmatprep.subr.mxu0 0.0
    %393 = vmatpush1.msra.mxu0 0.0
    %394 = vmatprep.subr.mxu0 0.0
    %395 = vmatpush1.msra.mxu0 0.0
    %396 = vmatprep.subr.mxu0 0.0
    %397 = vmatpush1.msra.mxu0 0.0
    %398 = vmatprep.subr.mxu0 0.0
    %399 = vmatpush1.msra.mxu0 0.0
    %400 = vmatprep.subr.mxu0 0.0
    %401 = vmatpush1.msra.mxu0 0.0
    %402 = vmatprep.subr.mxu0 0.0
    %403 = vmatpush1.msra.mxu0 0.0
    %404 = vmatprep.subr.mxu0 0.0
    %405 = vmatpush1.msra.mxu0 0.0
    %406 = vmatprep.subr.mxu0 0.0
    %407 = vmatpush1.msra.mxu0 0.0
    %408 = vmatprep.subr.mxu0 0.0
    %409 = vmatpush1.msra.mxu0 0.0
    %410 = vmatprep.subr.mxu0 0.0
    %411 = vmatpush1.msra.mxu0 0.0
    %412 = vmatprep.subr.mxu0 0.0
    %413 = vmatpush1.msra.mxu0 0.0
    %414 = vmatprep.subr.mxu0 0.0
    %415 = vmatpush1.msra.mxu0 0.0
    %416 = vmatprep.subr.mxu0 0.0
    %417 = vmatpush1.msra.mxu0 0.0
    %418 = vmatprep.mubr.f32.mxu0 0.0
    %419 = vmatmul.mubr.f32.gmra.mrb[0].mxu0 %v331
    %v420 = vpop.f32.mrb[0].mxu0
    %v421 = vadd.f32 %v292, %v420
    %v422 = vpop.f32.mrb[0].mxu0
    %423 = vmatprep.mubr.f32.mxu0 0.0
    %424 = vmatmul.mubr.f32.gmra.mrb[0].mxu0 %v334
    %v425 = vpop.f32.mrb[0].mxu0
    %v426 = vadd.f32 %v297, %v425
    %v427 = vpop.f32.mrb[0].mxu0
    %428 = vmatprep.mubr.f32.mxu0 0.0
    %429 = vmatmul.mubr.f32.gmra.mrb[0].mxu0 %v337
    %v430 = vpop.f32.mrb[0].mxu0
    %v431 = vadd.f32 %v302, %v430
    %v432 = vpop.f32.mrb[0].mxu0
    %433 = vmatprep.mubr.f32.mxu0 0.0
    %434 = vmatmul.mubr.f32.gmra.mrb[0].mxu0 %v340
    %v435 = vpop.f32.mrb[0].mxu0
    %v436 = vadd.f32 %v307, %v435
    %v437 = vpop.f32.mrb[0].mxu0
    %438 = vmatprep.mubr.f32.mxu0 0.0
    %439 = vmatmul.mubr.f32.gmra.mrb[0].mxu0 %v343
    %v440 = vpop.f32.mrb[0].mxu0
    %v441 = vadd.f32 %v312, %v440
    %v442 = vpop.f32.mrb[0].mxu0
    %443 = vmatprep.mubr.f32.mxu0 0.0
    %444 = vmatmul.mubr.f32.gmra.mrb[0].mxu0 %v346
    %v445 = vpop.f32.mrb[0].mxu0
    %v446 = vadd.f32 %v317, %v445
    %v447 = vpop.f32.mrb[0].mxu0
    %448 = vmatprep.mubr.f32.mxu0 0.0
    %449 = vmatmul.mubr.f32.gmra.mrb[0].mxu0 %v349
    %v450 = vpop.f32.mrb[0].mxu0
    %v451 = vadd.f32 %v322, %v450
    %v452 = vpop.f32.mrb[0].mxu0
    %453 = vmatprep.mubr.f32.mxu0 0.0
    %454 = vmatmul.mubr.f32.gmra.mrb[0].mxu0 %v352
    %v455 = vpop.f32.mrb[0].mxu0
    %v456 = vadd.f32 %v327, %v455
    %v457 = vpop.f32.mrb[0].mxu0
    %458 = vdwg.mxu0
    %v459 = vmul.f32 %v421, 0.5
    %v460 = vmul.f32 %v426, 0.5
    %v461 = vmul.f32 %v431, 0.5
    %v462 = vmul.f32 %v436, 0.5
    %v463 = vmul.f32 %v441, 0.5
    %v464 = vmul.f32 %v446, 0.5
    %v465 = vmul.f32 %v451, 0.5
    %v466 = vmul.f32 %v456, 0.5
    %v467 = vtanh.pop %v459
    %v468 = vtanh.pop %v460
    %v469 = vtanh.pop %v461
    %v470 = vtanh.pop %v462
    %v471 = vtanh.pop %v463
    %v472 = vtanh.pop %v464
    %v473 = vtanh.pop %v465
    %v474 = vtanh.pop %v466
    %v475 = vmul.f32 %v467, 0.5
    %v476 = vmul.f32 %v468, 0.5
    %v477 = vmul.f32 %v469, 0.5
    %v478 = vmul.f32 %v470, 0.5
    %v479 = vmul.f32 %v471, 0.5
    %v480 = vmul.f32 %v472, 0.5
    %v481 = vmul.f32 %v473, 0.5
    %v482 = vmul.f32 %v474, 0.5
    %v483 = vadd.f32 %v475, 0.5
    %v484 = vadd.f32 %v476, 0.5
    %v485 = vadd.f32 %v477, 0.5
    %v486 = vadd.f32 %v478, 0.5
    %v487 = vadd.f32 %v479, 0.5
    %v488 = vadd.f32 %v480, 0.5
    %v489 = vadd.f32 %v481, 0.5
    %v490 = vadd.f32 %v482, 0.5
    %v491 = vld [vmem:[%s7] sm:$0xff]
    %v492 = vld [vmem:[%s7 + $0x8] sm:$0xff]
    %v493 = vld [vmem:[%s7 + $0x10] sm:$0xff]
    %v494 = vld [vmem:[%s7 + $0x18] sm:$0xff]
    %v495 = vld [vmem:[%s7 + $0x20] sm:$0xff]
    %v496 = vld [vmem:[%s7 + $0x28] sm:$0xff]
    %v497 = vld [vmem:[%s7 + $0x30] sm:$0xff]
    %v498 = vld [vmem:[%s7 + $0x38] sm:$0xff]
    %v499 = vld [vmem:[%s8] sm:$0xff]
    %v500 = vld [vmem:[%s8 + $0x8] sm:$0xff]
    %v501 = vld [vmem:[%s8 + $0x10] sm:$0xff]
    %v502 = vld [vmem:[%s8 + $0x18] sm:$0xff]
    %v503 = vld [vmem:[%s8 + $0x20] sm:$0xff]
    %v504 = vld [vmem:[%s8 + $0x28] sm:$0xff]
    %v505 = vld [vmem:[%s8 + $0x30] sm:$0xff]
    %v506 = vld [vmem:[%s8 + $0x38] sm:$0xff]
    %508 = vset.pattern.permute.xlu0 0
    %509 = vperm.xlu0 %508, %v499
    %v510 = vpop.permute.xlu0 %509
    %513 = vset.pattern.permute.xlu0 0
    %514 = vperm.xlu0 %513, %v500
    %v515 = vpop.permute.xlu0 %514
    %518 = vset.pattern.permute.xlu0 0
    %519 = vperm.xlu0 %518, %v501
    %v520 = vpop.permute.xlu0 %519
    %523 = vset.pattern.permute.xlu0 0
    %524 = vperm.xlu0 %523, %v502
    %v525 = vpop.permute.xlu0 %524
    %528 = vset.pattern.permute.xlu0 0
    %529 = vperm.xlu0 %528, %v503
    %v530 = vpop.permute.xlu0 %529
    %533 = vset.pattern.permute.xlu0 0
    %534 = vperm.xlu0 %533, %v504
    %v535 = vpop.permute.xlu0 %534
    %538 = vset.pattern.permute.xlu0 0
    %539 = vperm.xlu0 %538, %v505
    %v540 = vpop.permute.xlu0 %539
    %543 = vset.pattern.permute.xlu0 0
    %544 = vperm.xlu0 %543, %v506
    %v545 = vpop.permute.xlu0 %544
    %v548 = vsel %vm329, %v491, 0
    %v551 = vsel %vm329, %v492, 0
    %v554 = vsel %vm329, %v493, 0
    %v557 = vsel %vm329, %v494, 0
    %v560 = vsel %vm329, %v495, 0
    %v563 = vsel %vm329, %v496, 0
    %v566 = vsel %vm329, %v497, 0
    %v569 = vsel %vm329, %v498, 0
    %571 = vmatprep.subr.mxu0 0.0
    %572 = vmatpush1.msra.mxu0 %v483
    %573 = vmatprep.subr.mxu0 0.0
    %574 = vmatpush1.msra.mxu0 %v484
    %575 = vmatprep.subr.mxu0 0.0
    %576 = vmatpush1.msra.mxu0 %v485
    %577 = vmatprep.subr.mxu0 0.0
    %578 = vmatpush1.msra.mxu0 %v486
    %579 = vmatprep.subr.mxu0 0.0
    %580 = vmatpush1.msra.mxu0 %v487
    %581 = vmatprep.subr.mxu0 0.0
    %582 = vmatpush1.msra.mxu0 %v488
    %583 = vmatprep.subr.mxu0 0.0
    %584 = vmatpush1.msra.mxu0 %v489
    %585 = vmatprep.subr.mxu0 0.0
    %586 = vmatpush1.msra.mxu0 %v490
    %587 = vmatprep.subr.mxu0 0.0
    %588 = vmatpush1.msra.mxu0 0.0
    %589 = vmatprep.subr.mxu0 0.0
    %590 = vmatpush1.msra.mxu0 0.0
    %591 = vmatprep.subr.mxu0 0.0
    %592 = vmatpush1.msra.mxu0 0.0
    %593 = vmatprep.subr.mxu0 0.0
    %594 = vmatpush1.msra.mxu0 0.0
    %595 = vmatprep.subr.mxu0 0.0
    %596 = vmatpush1.msra.mxu0 0.0
    %597 = vmatprep.subr.mxu0 0.0
    %598 = vmatpush1.msra.mxu0 0.0
    %599 = vmatprep.subr.mxu0 0.0
    %600 = vmatpush1.msra.mxu0 0.0
    %601 = vmatprep.subr.mxu0 0.0
    %602 = vmatpush1.msra.mxu0 0.0
    %603 = vmatprep.subr.mxu0 0.0
    %604 = vmatpush1.msra.mxu0 0.0
    %605 = vmatprep.subr.mxu0 0.0
    %606 = vmatpush1.msra.mxu0 0.0
    %607 = vmatprep.subr.mxu0 0.0
    %608 = vmatpush1.msra.mxu0 0.0
    %609 = vmatprep.subr.mxu0 0.0
    %610 = vmatpush1.msra.mxu0 0.0
    %611 = vmatprep.subr.mxu0 0.0
    %612 = vmatpush1.msra.mxu0 0.0
    %613 = vmatprep.subr.mxu0 0.0
    %614 = vmatpush1.msra.mxu0 0.0
    %615 = vmatprep.subr.mxu0 0.0
    %616 = vmatpush1.msra.mxu0 0.0
    %617 = vmatprep.subr.mxu0 0.0
    %618 = vmatpush1.msra.mxu0 0.0
    %619 = vmatprep.subr.mxu0 0.0
    %620 = vmatpush1.msra.mxu0 0.0
    %621 = vmatprep.subr.mxu0 0.0
    %622 = vmatpush1.msra.mxu0 0.0
    %623 = vmatprep.subr.mxu0 0.0
    %624 = vmatpush1.msra.mxu0 0.0
    %625 = vmatprep.subr.mxu0 0.0
    %626 = vmatpush1.msra.mxu0 0.0
    %627 = vmatprep.subr.mxu0 0.0
    %628 = vmatpush1.msra.mxu0 0.0
    %629 = vmatprep.subr.mxu0 0.0
    %630 = vmatpush1.msra.mxu0 0.0
    %631 = vmatprep.subr.mxu0 0.0
    %632 = vmatpush1.msra.mxu0 0.0
    %633 = vmatprep.subr.mxu0 0.0
    %634 = vmatpush1.msra.mxu0 0.0
    %635 = vmatprep.mubr.f32.mxu0 0.0
    %636 = vmatmul.mubr.f32.gmra.mrb[0].mxu0 %v548
    %v637 = vpop.f32.mrb[0].mxu0
    %v638 = vadd.f32 %v510, %v637
    %v639 = vpop.f32.mrb[0].mxu0
    %640 = vmatprep.mubr.f32.mxu0 0.0
    %641 = vmatmul.mubr.f32.gmra.mrb[0].mxu0 %v551
    %v642 = vpop.f32.mrb[0].mxu0
    %v643 = vadd.f32 %v515, %v642
    %v644 = vpop.f32.mrb[0].mxu0
    %645 = vmatprep.mubr.f32.mxu0 0.0
    %646 = vmatmul.mubr.f32.gmra.mrb[0].mxu0 %v554
    %v647 = vpop.f32.mrb[0].mxu0
    %v648 = vadd.f32 %v520, %v647
    %v649 = vpop.f32.mrb[0].mxu0
    %650 = vmatprep.mubr.f32.mxu0 0.0
    %651 = vmatmul.mubr.f32.gmra.mrb[0].mxu0 %v557
    %v652 = vpop.f32.mrb[0].mxu0
    %v653 = vadd.f32 %v525, %v652
    %v654 = vpop.f32.mrb[0].mxu0
    %655 = vmatprep.mubr.f32.mxu0 0.0
    %656 = vmatmul.mubr.f32.gmra.mrb[0].mxu0 %v560
    %v657 = vpop.f32.mrb[0].mxu0
    %v658 = vadd.f32 %v530, %v657
    %v659 = vpop.f32.mrb[0].mxu0
    %660 = vmatprep.mubr.f32.mxu0 0.0
    %661 = vmatmul.mubr.f32.gmra.mrb[0].mxu0 %v563
    %v662 = vpop.f32.mrb[0].mxu0
    %v663 = vadd.f32 %v535, %v662
    %v664 = vpop.f32.mrb[0].mxu0
    %665 = vmatprep.mubr.f32.mxu0 0.0
    %666 = vmatmul.mubr.f32.gmra.mrb[0].mxu0 %v566
    %v667 = vpop.f32.mrb[0].mxu0
    %v668 = vadd.f32 %v540, %v667
    %v669 = vpop.f32.mrb[0].mxu0
    %670 = vmatprep.mubr.f32.mxu0 0.0
    %671 = vmatmul.mubr.f32.gmra.mrb[0].mxu0 %v569
    %v672 = vpop.f32.mrb[0].mxu0
    %v673 = vadd.f32 %v545, %v672
    %v674 = vpop.f32.mrb[0].mxu0
    %675 = vdwg.mxu0
    %v676 = vmul.f32 %v638, 0.5
    %v677 = vmul.f32 %v643, 0.5
    %v678 = vmul.f32 %v648, 0.5
    %v679 = vmul.f32 %v653, 0.5
    %v680 = vmul.f32 %v658, 0.5
    %v681 = vmul.f32 %v663, 0.5
    %v682 = vmul.f32 %v668, 0.5
    %v683 = vmul.f32 %v673, 0.5
    %v684 = vtanh.pop %v676
    %v685 = vtanh.pop %v677
    %v686 = vtanh.pop %v678
    %v687 = vtanh.pop %v679
    %v688 = vtanh.pop %v680
    %v689 = vtanh.pop %v681
    %v690 = vtanh.pop %v682
    %v691 = vtanh.pop %v683
    %v692 = vmul.f32 %v684, 0.5
    %v693 = vmul.f32 %v685, 0.5
    %v694 = vmul.f32 %v686, 0.5
    %v695 = vmul.f32 %v687, 0.5
    %v696 = vmul.f32 %v688, 0.5
    %v697 = vmul.f32 %v689, 0.5
    %v698 = vmul.f32 %v690, 0.5
    %v699 = vmul.f32 %v691, 0.5
    %v700 = vadd.f32 %v692, 0.5
    %v701 = vadd.f32 %v693, 0.5
    %v702 = vadd.f32 %v694, 0.5
    %v703 = vadd.f32 %v695, 0.5
    %v704 = vadd.f32 %v696, 0.5
    %v705 = vadd.f32 %v697, 0.5
    %v706 = vadd.f32 %v698, 0.5
    %v707 = vadd.f32 %v699, 0.5
    %v708 = vld [vmem:[%s9] sm:$0xff]
    %v709 = vld [vmem:[%s9 + $0x8] sm:$0xff]
    %v710 = vld [vmem:[%s9 + $0x10] sm:$0xff]
    %v711 = vld [vmem:[%s9 + $0x18] sm:$0xff]
    %v712 = vld [vmem:[%s9 + $0x20] sm:$0xff]
    %v713 = vld [vmem:[%s9 + $0x28] sm:$0xff]
    %v714 = vld [vmem:[%s9 + $0x30] sm:$0xff]
    %v715 = vld [vmem:[%s9 + $0x38] sm:$0xff]
    %v716 = vld [vmem:[%s10] sm:$0xff]
    %v717 = vld [vmem:[%s10 + $0x8] sm:$0xff]
    %v718 = vld [vmem:[%s10 + $0x10] sm:$0xff]
    %v719 = vld [vmem:[%s10 + $0x18] sm:$0xff]
    %v720 = vld [vmem:[%s10 + $0x20] sm:$0xff]
    %v721 = vld [vmem:[%s10 + $0x28] sm:$0xff]
    %v722 = vld [vmem:[%s10 + $0x30] sm:$0xff]
    %v723 = vld [vmem:[%s10 + $0x38] sm:$0xff]
    %725 = vset.pattern.permute.xlu0 0
    %726 = vperm.xlu0 %725, %v716
    %v727 = vpop.permute.xlu0 %726
    %730 = vset.pattern.permute.xlu0 0
    %731 = vperm.xlu0 %730, %v717
    %v732 = vpop.permute.xlu0 %731
    %735 = vset.pattern.permute.xlu0 0
    %736 = vperm.xlu0 %735, %v718
    %v737 = vpop.permute.xlu0 %736
    %740 = vset.pattern.permute.xlu0 0
    %741 = vperm.xlu0 %740, %v719
    %v742 = vpop.permute.xlu0 %741
    %745 = vset.pattern.permute.xlu0 0
    %746 = vperm.xlu0 %745, %v720
    %v747 = vpop.permute.xlu0 %746
    %750 = vset.pattern.permute.xlu0 0
    %751 = vperm.xlu0 %750, %v721
    %v752 = vpop.permute.xlu0 %751
    %755 = vset.pattern.permute.xlu0 0
    %756 = vperm.xlu0 %755, %v722
    %v757 = vpop.permute.xlu0 %756
    %760 = vset.pattern.permute.xlu0 0
    %761 = vperm.xlu0 %760, %v723
    %v762 = vpop.permute.xlu0 %761
    %v765 = vsel %vm329, %v708, 0
    %v768 = vsel %vm329, %v709, 0
    %v771 = vsel %vm329, %v710, 0
    %v774 = vsel %vm329, %v711, 0
    %v777 = vsel %vm329, %v712, 0
    %v780 = vsel %vm329, %v713, 0
    %v783 = vsel %vm329, %v714, 0
    %v786 = vsel %vm329, %v715, 0
    %788 = vmatprep.subr.mxu0 0.0
    %789 = vmatpush1.msra.mxu0 %v700
    %790 = vmatprep.subr.mxu0 0.0
    %791 = vmatpush1.msra.mxu0 %v701
    %792 = vmatprep.subr.mxu0 0.0
    %793 = vmatpush1.msra.mxu0 %v702
    %794 = vmatprep.subr.mxu0 0.0
    %795 = vmatpush1.msra.mxu0 %v703
    %796 = vmatprep.subr.mxu0 0.0
    %797 = vmatpush1.msra.mxu0 %v704
    %798 = vmatprep.subr.mxu0 0.0
    %799 = vmatpush1.msra.mxu0 %v705
    %800 = vmatprep.subr.mxu0 0.0
    %801 = vmatpush1.msra.mxu0 %v706
    %802 = vmatprep.subr.mxu0 0.0
    %803 = vmatpush1.msra.mxu0 %v707
    %804 = vmatprep.subr.mxu0 0.0
    %805 = vmatpush1.msra.mxu0 0.0
    %806 = vmatprep.subr.mxu0 0.0
    %807 = vmatpush1.msra.mxu0 0.0
    %808 = vmatprep.subr.mxu0 0.0
    %809 = vmatpush1.msra.mxu0 0.0
    %810 = vmatprep.subr.mxu0 0.0
    %811 = vmatpush1.msra.mxu0 0.0
    %812 = vmatprep.subr.mxu0 0.0
    %813 = vmatpush1.msra.mxu0 0.0
    %814 = vmatprep.subr.mxu0 0.0
    %815 = vmatpush1.msra.mxu0 0.0
    %816 = vmatprep.subr.mxu0 0.0
    %817 = vmatpush1.msra.mxu0 0.0
    %818 = vmatprep.subr.mxu0 0.0
    %819 = vmatpush1.msra.mxu0 0.0
    %820 = vmatprep.subr.mxu0 0.0
    %821 = vmatpush1.msra.mxu0 0.0
    %822 = vmatprep.subr.mxu0 0.0
    %823 = vmatpush1.msra.mxu0 0.0
    %824 = vmatprep.subr.mxu0 0.0
    %825 = vmatpush1.msra.mxu0 0.0
    %826 = vmatprep.subr.mxu0 0.0
    %827 = vmatpush1.msra.mxu0 0.0
    %828 = vmatprep.subr.mxu0 0.0
    %829 = vmatpush1.msra.mxu0 0.0
    %830 = vmatprep.subr.mxu0 0.0
    %831 = vmatpush1.msra.mxu0 0.0
    %832 = vmatprep.subr.mxu0 0.0
    %833 = vmatpush1.msra.mxu0 0.0
    %834 = vmatprep.subr.mxu0 0.0
    %835 = vmatpush1.msra.mxu0 0.0
    %836 = vmatprep.subr.mxu0 0.0
    %837 = vmatpush1.msra.mxu0 0.0
    %838 = vmatprep.subr.mxu0 0.0
    %839 = vmatpush1.msra.mxu0 0.0
    %840 = vmatprep.subr.mxu0 0.0
    %841 = vmatpush1.msra.mxu0 0.0
    %842 = vmatprep.subr.mxu0 0.0
    %843 = vmatpush1.msra.mxu0 0.0
    %844 = vmatprep.subr.mxu0 0.0
    %845 = vmatpush1.msra.mxu0 0.0
    %846 = vmatprep.subr.mxu0 0.0
    %847 = vmatpush1.msra.mxu0 0.0
    %848 = vmatprep.subr.mxu0 0.0
    %849 = vmatpush1.msra.mxu0 0.0
    %850 = vmatprep.subr.mxu0 0.0
    %851 = vmatpush1.msra.mxu0 0.0
    %852 = vmatprep.mubr.f32.mxu0 0.0
    %853 = vmatmul.mubr.f32.gmra.mrb[0].mxu0 %v765
    %v854 = vpop.f32.mrb[0].mxu0
    %v855 = vadd.f32 %v727, %v854
    %v856 = vpop.f32.mrb[0].mxu0
    %857 = vmatprep.mubr.f32.mxu0 0.0
    %858 = vmatmul.mubr.f32.gmra.mrb[0].mxu0 %v768
    %v859 = vpop.f32.mrb[0].mxu0
    %v860 = vadd.f32 %v732, %v859
    %v861 = vpop.f32.mrb[0].mxu0
    %862 = vmatprep.mubr.f32.mxu0 0.0
    %863 = vmatmul.mubr.f32.gmra.mrb[0].mxu0 %v771
    %v864 = vpop.f32.mrb[0].mxu0
    %v865 = vadd.f32 %v737, %v864
    %v866 = vpop.f32.mrb[0].mxu0
    %867 = vmatprep.mubr.f32.mxu0 0.0
    %868 = vmatmul.mubr.f32.gmra.mrb[0].mxu0 %v774
    %v869 = vpop.f32.mrb[0].mxu0
    %v870 = vadd.f32 %v742, %v869
    %v871 = vpop.f32.mrb[0].mxu0
    %872 = vmatprep.mubr.f32.mxu0 0.0
    %873 = vmatmul.mubr.f32.gmra.mrb[0].mxu0 %v777
    %v874 = vpop.f32.mrb[0].mxu0
    %v875 = vadd.f32 %v747, %v874
    %v876 = vpop.f32.mrb[0].mxu0
    %877 = vmatprep.mubr.f32.mxu0 0.0
    %878 = vmatmul.mubr.f32.gmra.mrb[0].mxu0 %v780
    %v879 = vpop.f32.mrb[0].mxu0
    %v880 = vadd.f32 %v752, %v879
    %v881 = vpop.f32.mrb[0].mxu0
    %882 = vmatprep.mubr.f32.mxu0 0.0
    %883 = vmatmul.mubr.f32.gmra.mrb[0].mxu0 %v783
    %v884 = vpop.f32.mrb[0].mxu0
    %v885 = vadd.f32 %v757, %v884
    %v886 = vpop.f32.mrb[0].mxu0
    %887 = vmatprep.mubr.f32.mxu0 0.0
    %888 = vmatmul.mubr.f32.gmra.mrb[0].mxu0 %v786
    %v889 = vpop.f32.mrb[0].mxu0
    %v890 = vadd.f32 %v762, %v889
    %v891 = vpop.f32.mrb[0].mxu0
    %892 = vdwg.mxu0
    %v893 = vmul.f32 %v855, 0.5
    %v894 = vmul.f32 %v860, 0.5
    %v895 = vmul.f32 %v865, 0.5
    %v896 = vmul.f32 %v870, 0.5
    %v897 = vmul.f32 %v875, 0.5
    %v898 = vmul.f32 %v880, 0.5
    %v899 = vmul.f32 %v885, 0.5
    %v900 = vmul.f32 %v890, 0.5
    %v901 = vtanh.pop %v893
    %v902 = vtanh.pop %v894
    %v903 = vtanh.pop %v895
    %v904 = vtanh.pop %v896
    %v905 = vtanh.pop %v897
    %v906 = vtanh.pop %v898
    %v907 = vtanh.pop %v899
    %v908 = vtanh.pop %v900
    %v909 = vmul.f32 %v901, 0.5
    %v910 = vmul.f32 %v902, 0.5
    %v911 = vmul.f32 %v903, 0.5
    %v912 = vmul.f32 %v904, 0.5
    %v913 = vmul.f32 %v905, 0.5
    %v914 = vmul.f32 %v906, 0.5
    %v915 = vmul.f32 %v907, 0.5
    %v916 = vmul.f32 %v908, 0.5
    %v917 = vadd.f32 %v909, 0.5
    %v918 = vadd.f32 %v910, 0.5
    %v919 = vadd.f32 %v911, 0.5
    %v920 = vadd.f32 %v912, 0.5
    %v921 = vadd.f32 %v913, 0.5
    %v922 = vadd.f32 %v914, 0.5
    %v923 = vadd.f32 %v915, 0.5
    %v924 = vadd.f32 %v916, 0.5
    %v925 = vld [vmem:[%s11] sm:$0xff]
    %v926 = vld [vmem:[%s11 + $0x8] sm:$0xff]
    %v927 = vld [vmem:[%s11 + $0x10] sm:$0xff]
    %v928 = vld [vmem:[%s11 + $0x18] sm:$0xff]
    %v929 = vld [vmem:[%s11 + $0x20] sm:$0xff]
    %v930 = vld [vmem:[%s11 + $0x28] sm:$0xff]
    %v931 = vld [vmem:[%s11 + $0x30] sm:$0xff]
    %v932 = vld [vmem:[%s11 + $0x38] sm:$0xff]
    %v933 = vld [vmem:[%s12] sm:$0xff]
    %v934 = vld [vmem:[%s12 + $0x8] sm:$0xff]
    %v935 = vld [vmem:[%s12 + $0x10] sm:$0xff]
    %v936 = vld [vmem:[%s12 + $0x18] sm:$0xff]
    %v937 = vld [vmem:[%s12 + $0x20] sm:$0xff]
    %v938 = vld [vmem:[%s12 + $0x28] sm:$0xff]
    %v939 = vld [vmem:[%s12 + $0x30] sm:$0xff]
    %v940 = vld [vmem:[%s12 + $0x38] sm:$0xff]
    %942 = vset.pattern.permute.xlu0 0
    %943 = vperm.xlu0 %942, %v933
    %v944 = vpop.permute.xlu0 %943
    %947 = vset.pattern.permute.xlu0 0
    %948 = vperm.xlu0 %947, %v934
    %v949 = vpop.permute.xlu0 %948
    %952 = vset.pattern.permute.xlu0 0
    %953 = vperm.xlu0 %952, %v935
    %v954 = vpop.permute.xlu0 %953
    %957 = vset.pattern.permute.xlu0 0
    %958 = vperm.xlu0 %957, %v936
    %v959 = vpop.permute.xlu0 %958
    %962 = vset.pattern.permute.xlu0 0
    %963 = vperm.xlu0 %962, %v937
    %v964 = vpop.permute.xlu0 %963
    %967 = vset.pattern.permute.xlu0 0
    %968 = vperm.xlu0 %967, %v938
    %v969 = vpop.permute.xlu0 %968
    %972 = vset.pattern.permute.xlu0 0
    %973 = vperm.xlu0 %972, %v939
    %v974 = vpop.permute.xlu0 %973
    %977 = vset.pattern.permute.xlu0 0
    %978 = vperm.xlu0 %977, %v940
    %v979 = vpop.permute.xlu0 %978
    %v982 = vsel %vm329, %v925, 0
    %v985 = vsel %vm329, %v926, 0
    %v988 = vsel %vm329, %v927, 0
    %v991 = vsel %vm329, %v928, 0
    %v994 = vsel %vm329, %v929, 0
    %v997 = vsel %vm329, %v930, 0
    %v1000 = vsel %vm329, %v931, 0
    %v1003 = vsel %vm329, %v932, 0
    %1005 = vmatprep.subr.mxu0 0.0
    %1006 = vmatpush1.msra.mxu0 %v917
    %1007 = vmatprep.subr.mxu0 0.0
    %1008 = vmatpush1.msra.mxu0 %v918
    %1009 = vmatprep.subr.mxu0 0.0
    %1010 = vmatpush1.msra.mxu0 %v919
    %1011 = vmatprep.subr.mxu0 0.0
    %1012 = vmatpush1.msra.mxu0 %v920
    %1013 = vmatprep.subr.mxu0 0.0
    %1014 = vmatpush1.msra.mxu0 %v921
    %1015 = vmatprep.subr.mxu0 0.0
    %1016 = vmatpush1.msra.mxu0 %v922
    %1017 = vmatprep.subr.mxu0 0.0
    %1018 = vmatpush1.msra.mxu0 %v923
    %1019 = vmatprep.subr.mxu0 0.0
    %1020 = vmatpush1.msra.mxu0 %v924
    %1021 = vmatprep.subr.mxu0 0.0
    %1022 = vmatpush1.msra.mxu0 0.0
    %1023 = vmatprep.subr.mxu0 0.0
    %1024 = vmatpush1.msra.mxu0 0.0
    %1025 = vmatprep.subr.mxu0 0.0
    %1026 = vmatpush1.msra.mxu0 0.0
    %1027 = vmatprep.subr.mxu0 0.0
    %1028 = vmatpush1.msra.mxu0 0.0
    %1029 = vmatprep.subr.mxu0 0.0
    %1030 = vmatpush1.msra.mxu0 0.0
    %1031 = vmatprep.subr.mxu0 0.0
    %1032 = vmatpush1.msra.mxu0 0.0
    %1033 = vmatprep.subr.mxu0 0.0
    %1034 = vmatpush1.msra.mxu0 0.0
    %1035 = vmatprep.subr.mxu0 0.0
    %1036 = vmatpush1.msra.mxu0 0.0
    %1037 = vmatprep.subr.mxu0 0.0
    %1038 = vmatpush1.msra.mxu0 0.0
    %1039 = vmatprep.subr.mxu0 0.0
    %1040 = vmatpush1.msra.mxu0 0.0
    %1041 = vmatprep.subr.mxu0 0.0
    %1042 = vmatpush1.msra.mxu0 0.0
    %1043 = vmatprep.subr.mxu0 0.0
    %1044 = vmatpush1.msra.mxu0 0.0
    %1045 = vmatprep.subr.mxu0 0.0
    %1046 = vmatpush1.msra.mxu0 0.0
    %1047 = vmatprep.subr.mxu0 0.0
    %1048 = vmatpush1.msra.mxu0 0.0
    %1049 = vmatprep.subr.mxu0 0.0
    %1050 = vmatpush1.msra.mxu0 0.0
    %1051 = vmatprep.subr.mxu0 0.0
    %1052 = vmatpush1.msra.mxu0 0.0
    %1053 = vmatprep.subr.mxu0 0.0
    %1054 = vmatpush1.msra.mxu0 0.0
    %1055 = vmatprep.subr.mxu0 0.0
    %1056 = vmatpush1.msra.mxu0 0.0
    %1057 = vmatprep.subr.mxu0 0.0
    %1058 = vmatpush1.msra.mxu0 0.0
    %1059 = vmatprep.subr.mxu0 0.0
    %1060 = vmatpush1.msra.mxu0 0.0
    %1061 = vmatprep.subr.mxu0 0.0
    %1062 = vmatpush1.msra.mxu0 0.0
    %1063 = vmatprep.subr.mxu0 0.0
    %1064 = vmatpush1.msra.mxu0 0.0
    %1065 = vmatprep.subr.mxu0 0.0
    %1066 = vmatpush1.msra.mxu0 0.0
    %1067 = vmatprep.subr.mxu0 0.0
    %1068 = vmatpush1.msra.mxu0 0.0
    %1069 = vmatprep.mubr.f32.mxu0 0.0
    %1070 = vmatmul.mubr.f32.gmra.mrb[0].mxu0 %v982
    %v1071 = vpop.f32.mrb[0].mxu0
    %v1072 = vadd.f32 %v944, %v1071
    %v1073 = vpop.f32.mrb[0].mxu0
    %1074 = vmatprep.mubr.f32.mxu0 0.0
    %1075 = vmatmul.mubr.f32.gmra.mrb[0].mxu0 %v985
    %v1076 = vpop.f32.mrb[0].mxu0
    %v1077 = vadd.f32 %v949, %v1076
    %v1078 = vpop.f32.mrb[0].mxu0
    %1079 = vmatprep.mubr.f32.mxu0 0.0
    %1080 = vmatmul.mubr.f32.gmra.mrb[0].mxu0 %v988
    %v1081 = vpop.f32.mrb[0].mxu0
    %v1082 = vadd.f32 %v954, %v1081
    %v1083 = vpop.f32.mrb[0].mxu0
    %1084 = vmatprep.mubr.f32.mxu0 0.0
    %1085 = vmatmul.mubr.f32.gmra.mrb[0].mxu0 %v991
    %v1086 = vpop.f32.mrb[0].mxu0
    %v1087 = vadd.f32 %v959, %v1086
    %v1088 = vpop.f32.mrb[0].mxu0
    %1089 = vmatprep.mubr.f32.mxu0 0.0
    %1090 = vmatmul.mubr.f32.gmra.mrb[0].mxu0 %v994
    %v1091 = vpop.f32.mrb[0].mxu0
    %v1092 = vadd.f32 %v964, %v1091
    %v1093 = vpop.f32.mrb[0].mxu0
    %1094 = vmatprep.mubr.f32.mxu0 0.0
    %1095 = vmatmul.mubr.f32.gmra.mrb[0].mxu0 %v997
    %v1096 = vpop.f32.mrb[0].mxu0
    %v1097 = vadd.f32 %v969, %v1096
    %v1098 = vpop.f32.mrb[0].mxu0
    %1099 = vmatprep.mubr.f32.mxu0 0.0
    %1100 = vmatmul.mubr.f32.gmra.mrb[0].mxu0 %v1000
    %v1101 = vpop.f32.mrb[0].mxu0
    %v1102 = vadd.f32 %v974, %v1101
    %v1103 = vpop.f32.mrb[0].mxu0
    %1104 = vmatprep.mubr.f32.mxu0 0.0
    %1105 = vmatmul.mubr.f32.gmra.mrb[0].mxu0 %v1003
    %v1106 = vpop.f32.mrb[0].mxu0
    %v1107 = vadd.f32 %v979, %v1106
    %v1108 = vpop.f32.mrb[0].mxu0
    %1109 = vdwg.mxu0
    %v1110 = vmul.f32 %v1072, 0.5
    %v1111 = vmul.f32 %v1077, 0.5
    %v1112 = vmul.f32 %v1082, 0.5
    %v1113 = vmul.f32 %v1087, 0.5
    %v1114 = vmul.f32 %v1092, 0.5
    %v1115 = vmul.f32 %v1097, 0.5
    %v1116 = vmul.f32 %v1102, 0.5
    %v1117 = vmul.f32 %v1107, 0.5
    %v1118 = vtanh.pop %v1110
    %v1119 = vtanh.pop %v1111
    %v1120 = vtanh.pop %v1112
    %v1121 = vtanh.pop %v1113
    %v1122 = vtanh.pop %v1114
    %v1123 = vtanh.pop %v1115
    %v1124 = vtanh.pop %v1116
    %v1125 = vtanh.pop %v1117
    %v1126 = vmul.f32 %v1118, 0.5
    %v1127 = vmul.f32 %v1119, 0.5
    %v1128 = vmul.f32 %v1120, 0.5
    %v1129 = vmul.f32 %v1121, 0.5
    %v1130 = vmul.f32 %v1122, 0.5
    %v1131 = vmul.f32 %v1123, 0.5
    %v1132 = vmul.f32 %v1124, 0.5
    %v1133 = vmul.f32 %v1125, 0.5
    %v1134 = vadd.f32 %v1126, 0.5
    %v1135 = vadd.f32 %v1127, 0.5
    %v1136 = vadd.f32 %v1128, 0.5
    %v1137 = vadd.f32 %v1129, 0.5
    %v1138 = vadd.f32 %v1130, 0.5
    %v1139 = vadd.f32 %v1131, 0.5
    %v1140 = vadd.f32 %v1132, 0.5
    %v1141 = vadd.f32 %v1133, 0.5
    %v1142 = vld [vmem:[%s13] sm:$0x3]
    %v1143 = vld [vmem:[%s14] sm:$0x3]
    %1145 = vset.pattern.permute.xlu0 0
    %1146 = vperm.xlu0 %1145, %v1143
    %v1147 = vpop.permute.xlu0 %1146
    %v1150 = vsel %vm329, %v1142, 0
    %1152 = vmatprep.subr.mxu0 0.0
    %1153 = vmatpush1.msra.mxu0 %v1134
    %1154 = vmatprep.subr.mxu0 0.0
    %1155 = vmatpush1.msra.mxu0 %v1135
    %1156 = vmatprep.subr.mxu0 0.0
    %1157 = vmatpush1.msra.mxu0 %v1136
    %1158 = vmatprep.subr.mxu0 0.0
    %1159 = vmatpush1.msra.mxu0 %v1137
    %1160 = vmatprep.subr.mxu0 0.0
    %1161 = vmatpush1.msra.mxu0 %v1138
    %1162 = vmatprep.subr.mxu0 0.0
    %1163 = vmatpush1.msra.mxu0 %v1139
    %1164 = vmatprep.subr.mxu0 0.0
    %1165 = vmatpush1.msra.mxu0 %v1140
    %1166 = vmatprep.subr.mxu0 0.0
    %1167 = vmatpush1.msra.mxu0 %v1141
    %1168 = vmatprep.subr.mxu0 0.0
    %1169 = vmatpush1.msra.mxu0 0.0
    %1170 = vmatprep.subr.mxu0 0.0
    %1171 = vmatpush1.msra.mxu0 0.0
    %1172 = vmatprep.subr.mxu0 0.0
    %1173 = vmatpush1.msra.mxu0 0.0
    %1174 = vmatprep.subr.mxu0 0.0
    %1175 = vmatpush1.msra.mxu0 0.0
    %1176 = vmatprep.subr.mxu0 0.0
    %1177 = vmatpush1.msra.mxu0 0.0
    %1178 = vmatprep.subr.mxu0 0.0
    %1179 = vmatpush1.msra.mxu0 0.0
    %1180 = vmatprep.subr.mxu0 0.0
    %1181 = vmatpush1.msra.mxu0 0.0
    %1182 = vmatprep.subr.mxu0 0.0
    %1183 = vmatpush1.msra.mxu0 0.0
    %1184 = vmatprep.subr.mxu0 0.0
    %1185 = vmatpush1.msra.mxu0 0.0
    %1186 = vmatprep.subr.mxu0 0.0
    %1187 = vmatpush1.msra.mxu0 0.0
    %1188 = vmatprep.subr.mxu0 0.0
    %1189 = vmatpush1.msra.mxu0 0.0
    %1190 = vmatprep.subr.mxu0 0.0
    %1191 = vmatpush1.msra.mxu0 0.0
    %1192 = vmatprep.subr.mxu0 0.0
    %1193 = vmatpush1.msra.mxu0 0.0
    %1194 = vmatprep.subr.mxu0 0.0
    %1195 = vmatpush1.msra.mxu0 0.0
    %1196 = vmatprep.subr.mxu0 0.0
    %1197 = vmatpush1.msra.mxu0 0.0
    %1198 = vmatprep.subr.mxu0 0.0
    %1199 = vmatpush1.msra.mxu0 0.0
    %1200 = vmatprep.subr.mxu0 0.0
    %1201 = vmatpush1.msra.mxu0 0.0
    %1202 = vmatprep.subr.mxu0 0.0
    %1203 = vmatpush1.msra.mxu0 0.0
    %1204 = vmatprep.subr.mxu0 0.0
    %1205 = vmatpush1.msra.mxu0 0.0
    %1206 = vmatprep.subr.mxu0 0.0
    %1207 = vmatpush1.msra.mxu0 0.0
    %1208 = vmatprep.subr.mxu0 0.0
    %1209 = vmatpush1.msra.mxu0 0.0
    %1210 = vmatprep.subr.mxu0 0.0
    %1211 = vmatpush1.msra.mxu0 0.0
    %1212 = vmatprep.subr.mxu0 0.0
    %1213 = vmatpush1.msra.mxu0 0.0
    %1214 = vmatprep.subr.mxu0 0.0
    %1215 = vmatpush1.msra.mxu0 0.0
    %1216 = vmatprep.mubr.f32.mxu0 0.0
    %1217 = vmatmul.mubr.f32.gmra.mrb[0].mxu0 %v1150
    %v1218 = vpop.f32.mrb[0].mxu0
    %v1219 = vadd.f32 %v1147, %v1218
    %v1220 = vpop.f32.mrb[0].mxu0
    %1221 = vdwg.mxu0
    %1222 = vst [vmem:[#allocation2] sm:$0x3] %v1219
    // Predicated region
    $region62: #{tpu_custom_call.1} parent=1 // pred_check
      _
    $region63: #{tpu_custom_call.1} parent=1 // pred_check_branch
      %1224 = sbr.rel (0) target = $region65
    $region64: #{tpu_custom_call.1} parent=1 // pred_region
      %s1226 = ssub.s32 32, 32
      %1227 = vsyncadd [#allocation3], %s1226
      %s1229 = sshll.u32 [#allocation2], 4
      %s1230 = int_to_ptr.vmem [resolvable:$true] %s1229
      %1232 = dma.vmem_to_hbm [thread:$0]  %s1230, 32, %s15, [#allocation3]
    $region65: #{tpu_custom_call.1} parent=1 // pred_fallthru
      _
    // Predicated region
    $region66: #{tpu_custom_call.1} parent=1 // pred_check
      _
    $region67: #{tpu_custom_call.1} parent=1 // pred_check_branch
      %1234 = sbr.rel (0) target = $region69
    $region68: #{tpu_custom_call.1} parent=1 // pred_region
      %1235 = dma.done [#allocation3], 32
    $region69: #{tpu_custom_call.1} parent=1 // pred_fallthru
      _
    %1236 = vsyncpa [#allocation3], 1

</llo_original>
